<compile_context>
chip_gen: v7x
topology: tpu7x:2x2x1
jax: 0.10.0
libtpu: 0.0.40
codegen_flags: <defaults>
</compile_context>

<pallas_src>
import functools

import jax
import jax.numpy as jnp
from jax.experimental import pallas as pl
from jax.experimental.pallas import tpu as pltpu

_MIB = 1024 * 1024


# ---------------------------------------------------------------------------
# Kernels
# ---------------------------------------------------------------------------
def _seq_xent_row_kernel(logits_ref, targets_ref, mask_ref, out_ref, *,
                         label_smoothing: float, num_classes: int):
    """Full-vocab row tile:  out = (logsumexp(x) - <w, x>) * mask.

    logits_ref : (TM, V) native dtype (f32 / bf16 / ...)
    targets_ref: (TM, 1) int32
    mask_ref   : (TM, 1) float32
    out_ref    : (TM, 1) float32
    """
    x = logits_ref[...]                                              # (TM, V) native
    # max & one-hot pick on the native dtype (exact); upcast only inside the exp
    # pass so no long-lived f32 copy of the tile exists.
    row_max = jnp.max(x, axis=-1, keepdims=True).astype(jnp.float32)          # (TM,1)
    ex = jnp.exp(x.astype(jnp.float32) - row_max)                              # streamed
    lse = row_max + jnp.log(jnp.sum(ex, axis=-1, keepdims=True))               # (TM,1)

    tgt = targets_ref[...]                                                     # (TM,1)
    col = jax.lax.broadcasted_iota(jnp.int32, x.shape, 1)
    # exactly one (or zero, if target OOB) nonzero per row -> exact in native dtype
    x_tgt = jnp.sum(jnp.where(col == tgt, x, 0), axis=-1,
                    keepdims=True).astype(jnp.float32)                         # (TM,1)

    if label_smoothing > 0.0:
        sv = label_smoothing / float(num_classes)
        sum_x = jnp.sum(x.astype(jnp.float32), axis=-1, keepdims=True)
        wdot = (1.0 - label_smoothing) * x_tgt + sv * sum_x
    else:
        wdot = x_tgt
    out_ref[...] = (lse - wdot) * mask_ref[...]


def _seq_xent_vsplit_kernel(logits_ref, targets_ref, mask_ref, out_ref,
                            m_sc, l_sc, p_sc, *,
                            label_smoothing: float, num_classes: int,
                            vocab_tile: int):
    """Vocab-split tile with online logsumexp (for very large V).

    Grid: (row_blocks, vocab_blocks) with the vocab axis "arbitrary".
    Scratch (all (TM,1) f32): m_sc running max, l_sc running exp-sum,
    p_sc running <w, x> accumulator.
    """
    j = pl.program_id(1)

    @pl.when(j == 0)
    def _():
        m_sc[...] = jnp.full_like(m_sc, -jnp.inf)
        l_sc[...] = jnp.zeros_like(l_sc)
        p_sc[...] = jnp.zeros_like(p_sc)

    x = logits_ref[...]                                              # (TM, TV) native
    col = jax.lax.broadcasted_iota(jnp.int32, x.shape, 1) + j * vocab_tile
    valid = col < num_classes                                        # ragged last block
    x_f32 = jnp.where(valid, x.astype(jnp.float32), -jnp.inf)

    m_prev = m_sc[...]
    m_new = jnp.maximum(m_prev, jnp.max(x_f32, axis=-1, keepdims=True))
    l_sc[...] = (jnp.exp(m_prev - m_new) * l_sc[...]
                 + jnp.sum(jnp.exp(x_f32 - m_new), axis=-1, keepdims=True))
    m_sc[...] = m_new

    tgt = targets_ref[...]
    x_tgt = jnp.sum(jnp.where(col == tgt, x, 0), axis=-1,
                    keepdims=True).astype(jnp.float32)
    if label_smoothing > 0.0:
        sv = label_smoothing / float(num_classes)
        sum_x = jnp.sum(jnp.where(valid, x.astype(jnp.float32), 0.0),
                        axis=-1, keepdims=True)
        p_sc[...] += (1.0 - label_smoothing) * x_tgt + sv * sum_x
    else:
        p_sc[...] += x_tgt

    @pl.when(j == pl.num_programs(1) - 1)
    def _():
        lse = m_sc[...] + jnp.log(l_sc[...])
        out_ref[...] = (lse - p_sc[...]) * mask_ref[...]


# ---------------------------------------------------------------------------
# Tiling plan
# ---------------------------------------------------------------------------
def _round_up(x: int, m: int) -> int:
    return -(-x // m) * m


def _vmem_budgets():
    """Generation-aware (data_budget_bytes, vmem_limit_bytes)."""
    try:
        cap = int(pltpu.get_tpu_info().vmem_capacity_bytes)
    except Exception:
        cap = 64 * _MIB                     # conservative: v7x per-TC VMEM
    data_budget = min(int(cap * 0.40), 56 * _MIB)   # 128 MiB parts -> ~51 MiB, v7x -> ~25 MiB
    vmem_limit = min(int(cap * 0.75), 100 * _MIB)   # 128 MiB parts -> 96 MiB,  v7x -> 48 MiB
    return data_budget, vmem_limit


# Bounds Mosaic unroll / compile time; per-step DMA is still >= ~1 MiB even at
# V=32 bf16, so the ~0.35us per-step overhead is well amortized.
_MAX_ROW_TILE = 16384


def _plan_tiling(n_rows: int, vocab: int, itemsize: int, smoothing: bool,
                 data_budget: int):
    """Returns ("row", TM, V) or ("vsplit", TM, TV)."""
    n_rounded = _round_up(n_rows, 8)
    # Honest live bytes/element for the row path after the algebraic rewrites:
    # double-buffered native input (2*isz) + ~2 streamed f32-ish tiles
    # (exp pass + iota/one-hot pick), +1 pass for the smoothing row-sum.
    per_elem_row = 2 * itemsize + (10 if smoothing else 8)
    bytes_per_row = vocab * per_elem_row + 128          # + targets/mask/out slack
    tm = (data_budget // bytes_per_row) // 8 * 8
    if tm >= 8:
        tm = min(tm, n_rounded, _MAX_ROW_TILE)
        if n_rounded > 8:
            # keep >= 4 grid steps: >= 2 per TensorCore on v7x (pipelining + balance)
            tm = min(tm, max(8, _round_up(-(-n_rows // 4), 8)))
        return "row", int(tm), int(vocab)
    # Vocab-split path (very large V): online logsumexp over a second grid axis.
    tm = min(256, n_rounded)
    per_elem_v = 2 * itemsize + 16          # + x_f32, exp, int32 col, masks
    tv = (data_budget // (tm * per_elem_v)) // 128 * 128
    tv = max(128, min(int(tv), _round_up(vocab, 128)))
    return "vsplit", int(tm), int(tv)


# ---------------------------------------------------------------------------
# Wrapper
# ---------------------------------------------------------------------------
def sequence_cross_entropy_with_logits(logits, targets, mask,
                                       label_smoothing=-1.0, reduce=None,
                                       *, _vocab_tile=None):
    """JAX/Pallas port of the PyTorch reference.

    logits : (B, T, V) float (any float dtype; DMA'd natively, upcast in-kernel)
    targets: (B, T)    int
    mask   : (B, T)    float
    reduce : None | "sentence" | "batch"
    _vocab_tile: test hook forcing the vocab-split path with the given tile.
    """
    B, T, V = logits.shape
    N = B * T

    # Native-dtype flat view: no f32 convert before the pallas_call, bf16 logits
    # stay bf16 through the DMA.
    logits_flat = logits.reshape(N, V)
    targets_flat = targets.reshape(N, 1).astype(jnp.int32)
    mask_flat = mask.reshape(N, 1).astype(jnp.float32)

    smoothing = float(label_smoothing) > 0.0
    data_budget, vmem_limit = _vmem_budgets()
    mode, tm, tv = _plan_tiling(N, V, jnp.dtype(logits.dtype).itemsize,
                                smoothing, data_budget)
    if _vocab_tile is not None and int(_vocab_tile) < V:
        mode, tv = "vsplit", int(_vocab_tile)

    if mode == "row":
        kernel = functools.partial(_seq_xent_row_kernel,
                                   label_smoothing=float(label_smoothing),
                                   num_classes=V)
        nll = pl.pallas_call(
            kernel,
            out_shape=jax.ShapeDtypeStruct((N, 1), jnp.float32),
            grid=(pl.cdiv(N, tm),),
            in_specs=[
                pl.BlockSpec((tm, V), lambda i: (i, 0)),
                pl.BlockSpec((tm, 1), lambda i: (i, 0)),
                pl.BlockSpec((tm, 1), lambda i: (i, 0)),
            ],
            out_specs=pl.BlockSpec((tm, 1), lambda i: (i, 0)),
            compiler_params=pltpu.CompilerParams(
                dimension_semantics=("parallel",),
                vmem_limit_bytes=vmem_limit),
        )(logits_flat, targets_flat, mask_flat)
    else:
        kernel = functools.partial(_seq_xent_vsplit_kernel,
                                   label_smoothing=float(label_smoothing),
                                   num_classes=V, vocab_tile=tv)
        nll = pl.pallas_call(
            kernel,
            out_shape=jax.ShapeDtypeStruct((N, 1), jnp.float32),
            grid=(pl.cdiv(N, tm), pl.cdiv(V, tv)),
            in_specs=[
                pl.BlockSpec((tm, tv), lambda i, j: (i, j)),
                pl.BlockSpec((tm, 1), lambda i, j: (i, 0)),
                pl.BlockSpec((tm, 1), lambda i, j: (i, 0)),
            ],
            out_specs=pl.BlockSpec((tm, 1), lambda i, j: (i, 0)),
            scratch_shapes=[pltpu.VMEM((tm, 1), jnp.float32)] * 3,
            compiler_params=pltpu.CompilerParams(
                dimension_semantics=("parallel", "arbitrary"),
                vmem_limit_bytes=vmem_limit),
        )(logits_flat, targets_flat, mask_flat)

    loss = nll.reshape(B, T)                 # already multiplied by mask
    if reduce:
        mask2d = mask.reshape(B, T).astype(jnp.float32)
        loss = loss.sum(axis=1) / (mask2d.sum(axis=1) + 1e-13)
        if reduce == 'batch':
            loss = loss.mean()
    return loss


class SequenceCrossEntropyLoss:
    """Stateless module mirroring the PyTorch nn.Module."""

    def __call__(self, logits, targets, mask, label_smoothing=-1, reduce=None):
        return sequence_cross_entropy_with_logits(
            logits, targets, mask, label_smoothing, reduce)


# ---------------------------------------------------------------------------
# Pure-JAX reference + self-test
# ---------------------------------------------------------------------------
def _reference(logits, targets, mask, label_smoothing, reduce):
    B, T, V = logits.shape
    lp = jax.nn.log_softmax(logits.reshape(-1, V).astype(jnp.float32), axis=-1)
    tgt = targets.reshape(-1).astype(jnp.int32)
    if label_smoothing > 0.0:
        sv = label_smoothing / float(V)
        oh = jax.nn.one_hot(tgt, V, dtype=jnp.float32) * (1.0 - label_smoothing) + sv
        nll = -(lp * oh).sum(-1)
    else:
        nll = -jnp.take_along_axis(lp, tgt[:, None], axis=1)[:, 0]
    loss = nll.reshape(B, T) * mask.astype(jnp.float32)
    if reduce:
        loss = loss.sum(1) / (mask.astype(jnp.float32).sum(1) + 1e-13)
        if reduce == 'batch':
            loss = loss.mean()
    return loss


if __name__ == "__main__":
    B, T, V = 2, 8, 32
    key = jax.random.PRNGKey(0)
    k1, k2, k3, k4 = jax.random.split(key, 4)

    lengths = jnp.array([T, T - 3])
    mask = (jnp.arange(T)[None, :] < lengths[:, None]).astype(jnp.float32)

    crit = SequenceCrossEntropyLoss()
    ok = True

    # ---- row-tiled path: f32 ----
    logits = jax.random.normal(k1, (B, T, V), dtype=jnp.float32)
    targets = jax.random.randint(k2, (B, T), 0, V, dtype=jnp.int32)
    for ls, red in [(-1, None), (0.1, None), (-1, 'sentence'), (0.1, 'batch')]:
        out = jax.block_until_ready(crit(logits, targets, mask,
                                         label_smoothing=ls, reduce=red))
        ref = jax.block_until_ready(_reference(logits, targets, mask, ls, red))
        ok &= bool(jnp.allclose(out, ref, atol=1e-5, rtol=1e-5))

    # ---- row-tiled path: bf16 (native-dtype DMA + in-kernel upcast) ----
    logits_bf16 = logits.astype(jnp.bfloat16)
    for ls, red in [(-1, None), (0.1, 'batch')]:
        out = jax.block_until_ready(crit(logits_bf16, targets, mask,
                                         label_smoothing=ls, reduce=red))
        ref = jax.block_until_ready(_reference(logits_bf16, targets, mask, ls, red))
        ok &= bool(jnp.allclose(out, ref, atol=1e-4, rtol=1e-4))

    # ---- ragged N (partial last row block) ----
    T3 = 7
    l3 = jax.random.normal(k3, (B, T3, V), dtype=jnp.float32)
    t3 = jax.random.randint(k4, (B, T3), 0, V, dtype=jnp.int32)
    mask3 = (jnp.arange(T3)[None, :] < jnp.array([T3, 4])[:, None]).astype(jnp.float32)
    for ls, red in [(-1, None), (0.1, 'batch')]:
        out = jax.block_until_ready(crit(l3, t3, mask3,
                                         label_smoothing=ls, reduce=red))
        ref = jax.block_until_ready(_reference(l3, t3, mask3, ls, red))
        ok &= bool(jnp.allclose(out, ref, atol=1e-5, rtol=1e-5))

    # ---- forced vocab-split path (online logsumexp), incl. ragged vocab tail ----
    for V2 in (512, 320):
        l2 = jax.random.normal(k3, (B, T, V2), dtype=jnp.float32)
        t2 = jax.random.randint(k4, (B, T), 0, V2, dtype=jnp.int32)
        for ls in (-1.0, 0.1):
            out = jax.block_until_ready(
                sequence_cross_entropy_with_logits(l2, t2, mask, ls, None,
                                                   _vocab_tile=128))
            ref = jax.block_until_ready(_reference(l2, t2, mask, ls, None))
            ok &= bool(jnp.allclose(out, ref, atol=3e-5, rtol=3e-5))
        out = jax.block_until_ready(
            sequence_cross_entropy_with_logits(l2.astype(jnp.bfloat16), t2, mask,
                                               0.1, 'batch', _vocab_tile=128))
        ref = jax.block_until_ready(
            _reference(l2.astype(jnp.bfloat16), t2, mask, 0.1, 'batch'))
        ok &= bool(jnp.allclose(out, ref, atol=1e-4, rtol=1e-4))

    print("KERNEL_OK" if ok else "KERNEL_MISMATCH")
</pallas_src>

<mosaic_0001>
module attributes {stable_mosaic.version = 11 : i64} {
  func.func @_seq_xent_row_kernel(%arg0: i32, %arg1: memref<8x32xf32, #tpu.memory_space<vmem>>, %arg2: memref<8x1xi32, #tpu.memory_space<vmem>>, %arg3: memref<8x1xf32, #tpu.memory_space<vmem>>, %arg4: memref<8x1xf32, #tpu.memory_space<vmem>>) attributes {dimension_semantics = [#tpu.dimension_semantics<parallel>], iteration_bounds = array<i64: 2>, scalar_prefetch = 0 : i64, scratch_operands = 0 : i64, tpu.core_type = #tpu.core_type<tc>, window_params = [{transform_indices = @transform_0, window_bounds = array<i64: 8, 32>}, {transform_indices = @transform_1, window_bounds = array<i64: 8, 1>}, {transform_indices = @transform_2, window_bounds = array<i64: 8, 1>}, {transform_indices = @transform_3, window_bounds = array<i64: 8, 1>}]} {
    %c0 = arith.constant 0 : index
    %c0_0 = arith.constant 0 : index
    %0 = vector.load %arg1[%c0, %c0_0] : memref<8x32xf32, #tpu.memory_space<vmem>>, vector<8x32xf32>
    %cst = arith.constant dense<0xFF800000> : vector<8xf32>
    %1 = vector.multi_reduction <maximumf>, %0, %cst [1] : vector<8x32xf32> to vector<8xf32>
    %2 = vector.shape_cast %1 : vector<8xf32> to vector<8x1xf32>
    %3 = vector.broadcast %2 : vector<8x1xf32> to vector<8x32xf32>
    %4 = arith.subf %0, %3 : vector<8x32xf32>
    %5 = math.exp %4 : vector<8x32xf32>
    %cst_1 = arith.constant dense<0.000000e+00> : vector<8xf32>
    %6 = vector.multi_reduction <add>, %5, %cst_1 [1] : vector<8x32xf32> to vector<8xf32>
    %7 = vector.shape_cast %6 : vector<8xf32> to vector<8x1xf32>
    %8 = math.log %7 : vector<8x1xf32>
    %9 = arith.addf %2, %8 : vector<8x1xf32>
    %c0_2 = arith.constant 0 : index
    %c0_3 = arith.constant 0 : index
    %10 = vector.load %arg2[%c0_2, %c0_3] : memref<8x1xi32, #tpu.memory_space<vmem>>, vector<8x1xi32>
    %11 = tpu.iota {dimensions = array<i32: 1>} : vector<8x32xi32>
    %12 = vector.broadcast %10 : vector<8x1xi32> to vector<8x32xi32>
    %13 = arith.cmpi eq, %11, %12 : vector<8x32xi32>
    %c0_i32 = arith.constant 0 : i32
    %14 = arith.sitofp %c0_i32 : i32 to f32
    %15 = vector.broadcast %14 : f32 to vector<8x32xf32>
    %16 = arith.select %13, %0, %15 : vector<8x32xi1>, vector<8x32xf32>
    %cst_4 = arith.constant dense<0.000000e+00> : vector<8xf32>
    %17 = vector.multi_reduction <add>, %16, %cst_4 [1] : vector<8x32xf32> to vector<8xf32>
    %18 = vector.shape_cast %17 : vector<8xf32> to vector<8x1xf32>
    %19 = arith.subf %9, %18 : vector<8x1xf32>
    %c0_5 = arith.constant 0 : index
    %c0_6 = arith.constant 0 : index
    %20 = vector.load %arg3[%c0_5, %c0_6] : memref<8x1xf32, #tpu.memory_space<vmem>>, vector<8x1xf32>
    %21 = arith.mulf %19, %20 : vector<8x1xf32>
    %c0_7 = arith.constant 0 : index
    %c0_8 = arith.constant 0 : index
    %22 = vector.load %arg4[%c0_7, %c0_8] : memref<8x1xf32, #tpu.memory_space<vmem>>, vector<8x1xf32>
    tpu.vector_store %arg4[%c0_7, %c0_8], %21 {strides = array<i32>} : memref<8x1xf32, #tpu.memory_space<vmem>>, vector<8x1xf32>,
    return
  }
  func.func @transform_0(%arg0: i32) -> (i32, i32) {
    %c0_i32 = arith.constant 0 : i32
    %c0_i32_0 = arith.constant 0 : i32
    return %arg0, %c0_i32 : i32, i32
  }
  func.func @transform_1(%arg0: i32) -> (i32, i32) {
    %c0_i32 = arith.constant 0 : i32
    %c0_i32_0 = arith.constant 0 : i32
    return %arg0, %c0_i32 : i32, i32
  }
  func.func @transform_2(%arg0: i32) -> (i32, i32) {
    %c0_i32 = arith.constant 0 : i32
    %c0_i32_0 = arith.constant 0 : i32
    return %arg0, %c0_i32 : i32, i32
  }
  func.func @transform_3(%arg0: i32) -> (i32, i32) {
    %c0_i32 = arith.constant 0 : i32
    %c0_i32_0 = arith.constant 0 : i32
    return %arg0, %c0_i32 : i32, i32
  }
}

</mosaic_0001>

<llo_original>
// kernel: tpu_custom_call.1
$region0: #{tpu_custom_call.1}
  #allocation0 [shape = 'u32[]', space=smem, size = 0x4, offset = 0x4, fixed_abs, tag = 'smem constant byte address 0x4 - core index']
  #allocation1 [shape = 'u32[144,128]{1,0:T(1,128)}', space=vmem, size = 0x12000, scoped, tag = 'internal scratch']
  %s0 = inlined_call_operand.vmem [shape: f32[16,32], index: 0, kind: input, shape index: {}]
  %s1 = inlined_call_operand.vmem [shape: s32[16,1], index: 1, kind: input, shape index: {}]
  %s2 = inlined_call_operand.vmem [shape: f32[16,1], index: 2, kind: input, shape index: {}]
  %s3 = inlined_call_operand.vmem [shape: f32[16,1], index: 3, kind: output, shape index: {}]
  %s4 = sld [smem:[#allocation0]]
  $region45: #{tpu_custom_call.1} parent=0
    _
  %s6 = ssub.s32 1, %s4
  %s7 = scalar_select 0, %s6, %s4
  loop: start=0, step=1, limit=4
  $region2: #{tpu_custom_call.1} parent=0 // loop_pre_header
    _
  $region3: #{tpu_custom_call.1} parent=0 // loop_header
    %s9 = sphi 0, %s13
    %p10 = scmp.ge.s32.totalorder %s9, 4
    %s19 = sphi 0, %s21
    %s22 = sphi 0, %s19
    %s23 = sphi 0, %s22
    %s39 = sphi 0, %s23
    %s45 = sphi 0, %s47
    %s48 = sphi 0, %s45
    %s49 = sphi 0, %s48
    %s65 = sphi 0, %s49
    %s71 = sphi 0, %s73
    %s74 = sphi 0, %s71
    %s75 = sphi 0, %s74
    %s91 = sphi 0, %s75
    %s97 = sphi 0, %s99
    %s100 = sphi 0, %s97
    %s101 = sphi 0, %s100
    %s117 = sphi 0, %s101
  $region4: #{tpu_custom_call.1} parent=0 // loop_header_branch
    %12 = sbr.rel (%p10) target = $region8
  $region5: #{tpu_custom_call.1} parent=0 // loop_body
    %s14 = ssub.s32 %s9, 1
    %s15 = ssub.s32 %s9, 2
    %s16 = sadd.s32 %s9, 1
    %s17 = ssub.s32 %s9, %s16
    %p18 = scmp.eq.s32.totalorder %s17, 0
    %s20 = sadd.s32 %s19, 1
    %s21 = scalar_select %p18, %s19, %s20
    %p24 = pneg %p18
    %p25 = scmp.eq.s32.totalorder %s9, 1
    %p26 = por %p24, %p25
    %p27 = scmp.ne.s32.totalorder %s19, %s22
    %p28 = scmp.eq.s32.totalorder %s9, 0
    %p29 = por %p27, %p28
    %p30 = scmp.ne.s32.totalorder %s19, %s22
    %p31 = scmp.eq.s32.totalorder %s14, 1
    %p32 = por %p30, %p31
    %p33 = scmp.ne.s32.totalorder %s22, %s23
    %p34 = scmp.eq.s32.totalorder %s14, 0
    %p35 = por %p33, %p34
    %p36 = scmp.ne.s32.totalorder %s22, %s23
    %p37 = scmp.eq.s32.totalorder %s15, 1
    %p38 = por %p36, %p37
    %p40 = scmp.ne.s32.totalorder %s23, %s39
    %p41 = scmp.eq.s32.totalorder %s15, 0
    %p42 = por %p40, %p41
    %s43 = ssub.s32 %s9, %s16
    %p44 = scmp.eq.s32.totalorder %s43, 0
    %s46 = sadd.s32 %s45, 1
    %s47 = scalar_select %p44, %s45, %s46
    %p50 = pneg %p44
    %p51 = scmp.eq.s32.totalorder %s9, 1
    %p52 = por %p50, %p51
    %p53 = scmp.ne.s32.totalorder %s45, %s48
    %p54 = scmp.eq.s32.totalorder %s9, 0
    %p55 = por %p53, %p54
    %p56 = scmp.ne.s32.totalorder %s45, %s48
    %p57 = scmp.eq.s32.totalorder %s14, 1
    %p58 = por %p56, %p57
    %p59 = scmp.ne.s32.totalorder %s48, %s49
    %p60 = scmp.eq.s32.totalorder %s14, 0
    %p61 = por %p59, %p60
    %p62 = scmp.ne.s32.totalorder %s48, %s49
    %p63 = scmp.eq.s32.totalorder %s15, 1
    %p64 = por %p62, %p63
    %p66 = scmp.ne.s32.totalorder %s49, %s65
    %p67 = scmp.eq.s32.totalorder %s15, 0
    %p68 = por %p66, %p67
    %s69 = ssub.s32 %s9, %s16
    %p70 = scmp.eq.s32.totalorder %s69, 0
    %s72 = sadd.s32 %s71, 1
    %s73 = scalar_select %p70, %s71, %s72
    %p76 = pneg %p70
    %p77 = scmp.eq.s32.totalorder %s9, 1
    %p78 = por %p76, %p77
    %p79 = scmp.ne.s32.totalorder %s71, %s74
    %p80 = scmp.eq.s32.totalorder %s9, 0
    %p81 = por %p79, %p80
    %p82 = scmp.ne.s32.totalorder %s71, %s74
    %p83 = scmp.eq.s32.totalorder %s14, 1
    %p84 = por %p82, %p83
    %p85 = scmp.ne.s32.totalorder %s74, %s75
    %p86 = scmp.eq.s32.totalorder %s14, 0
    %p87 = por %p85, %p86
    %p88 = scmp.ne.s32.totalorder %s74, %s75
    %p89 = scmp.eq.s32.totalorder %s15, 1
    %p90 = por %p88, %p89
    %p92 = scmp.ne.s32.totalorder %s75, %s91
    %p93 = scmp.eq.s32.totalorder %s15, 0
    %p94 = por %p92, %p93
    %s95 = ssub.s32 %s9, %s16
    %p96 = scmp.eq.s32.totalorder %s95, 0
    %s98 = sadd.s32 %s97, 1
    %s99 = scalar_select %p96, %s97, %s98
    %p102 = pneg %p96
    %p103 = scmp.eq.s32.totalorder %s9, 1
    %p104 = por %p102, %p103
    %p105 = scmp.ne.s32.totalorder %s97, %s100
    %p106 = scmp.eq.s32.totalorder %s9, 0
    %p107 = por %p105, %p106
    %p108 = scmp.ne.s32.totalorder %s97, %s100
    %p109 = scmp.eq.s32.totalorder %s14, 1
    %p110 = por %p108, %p109
    %p111 = scmp.ne.s32.totalorder %s100, %s101
    %p112 = scmp.eq.s32.totalorder %s14, 0
    %p113 = por %p111, %p112
    %p114 = scmp.ne.s32.totalorder %s100, %s101
    %p115 = scmp.eq.s32.totalorder %s15, 1
    %p116 = por %p114, %p115
    %p118 = scmp.ne.s32.totalorder %s101, %s117
    %p119 = scmp.eq.s32.totalorder %s15, 0
    %p120 = por %p118, %p119
    %p121 = scmp.le.s32.totalorder 1, %s9
    %p122 = scmp.lt.s32.totalorder %s9, 3
    %p123 = pnand %p121, %p122
    %p124 = pneg %p123
    // Predicated region
    $region9: #{tpu_custom_call.1} parent=5 // pred_check
      _
    $region10: #{tpu_custom_call.1} parent=5 // pred_check_branch
      %126 = sbr.rel (%p123) target = $region12
    $region11: #{tpu_custom_call.1} parent=5 // pred_region
      %s127 = ssub.s32 %s9, 1
    $region12: #{tpu_custom_call.1} parent=5 // pred_fallthru
      _
    %p128 = scmp.lt.s32.totalorder %s9, 2
    // Predicated region
    $region13: #{tpu_custom_call.1} parent=5 // pred_check
      %p129 = pneg %p128
    $region14: #{tpu_custom_call.1} parent=5 // pred_check_branch
      %131 = sbr.rel (%p129) target = $region16
    $region15: #{tpu_custom_call.1} parent=5 // pred_region
      // Predicated region
      $region17: #{tpu_custom_call.1} parent=15 // pred_check
        %p132 = pneg %p29
      $region18: #{tpu_custom_call.1} parent=15 // pred_check_branch
        %134 = sbr.rel (%p132) target = $region20
      $region19: #{tpu_custom_call.1} parent=15 // pred_region
        %p135 = scmp.lt.s32.totalorder %s9, 1
        %s136 = scalar_select %p135, %s9, 1
        %s137 = smul.addr %s136, 8
        %s138 = scalar_lea.vmem %s0, %s137
      $region20: #{tpu_custom_call.1} parent=15 // pred_fallthru
        _
      // Predicated region
      $region21: #{tpu_custom_call.1} parent=15 // pred_check
        %p139 = pneg %p55
      $region22: #{tpu_custom_call.1} parent=15 // pred_check_branch
        %141 = sbr.rel (%p139) target = $region24
      $region23: #{tpu_custom_call.1} parent=15 // pred_region
        %p142 = scmp.lt.s32.totalorder %s9, 1
        %s143 = scalar_select %p142, %s9, 1
        %s144 = smul.addr %s143, 8
        %s145 = scalar_lea.vmem %s1, %s144
      $region24: #{tpu_custom_call.1} parent=15 // pred_fallthru
        _
      // Predicated region
      $region25: #{tpu_custom_call.1} parent=15 // pred_check
        %p146 = pneg %p81
      $region26: #{tpu_custom_call.1} parent=15 // pred_check_branch
        %148 = sbr.rel (%p146) target = $region28
      $region27: #{tpu_custom_call.1} parent=15 // pred_region
        %p149 = scmp.lt.s32.totalorder %s9, 1
        %s150 = scalar_select %p149, %s9, 1
        %s151 = smul.addr %s150, 8
        %s152 = scalar_lea.vmem %s2, %s151
      $region28: #{tpu_custom_call.1} parent=15 // pred_fallthru
        _
    $region16: #{tpu_custom_call.1} parent=5 // pred_fallthru
      _
    %p153 = scmp.le.s32.totalorder 1, %s9
    %p154 = scmp.lt.s32.totalorder %s9, 3
    %p155 = pnand %p153, %p154
    %p156 = pneg %p155
    // Predicated region
    $region29: #{tpu_custom_call.1} parent=5 // pred_check
      _
    $region30: #{tpu_custom_call.1} parent=5 // pred_check_branch
      %158 = sbr.rel (%p155) target = $region32
    $region31: #{tpu_custom_call.1} parent=5 // pred_region
      %s159 = ssub.s32 %s9, 1
      %p160 = scmp.lt.s32.totalorder %s14, 1
      %s161 = scalar_select %p160, %s14, 1
      %s162 = smul.addr %s161, 8
      %s163 = scalar_lea.vmem %s0, %s162
      %p164 = pneg %p35
      %p165 = pneg %p32
      %p166 = scmp.lt.s32.totalorder %s14, 1
      %s167 = scalar_select %p166, %s14, 1
      %s168 = smul.addr %s167, 8
      %s169 = scalar_lea.vmem %s1, %s168
      %p170 = pneg %p61
      %p171 = pneg %p58
      %p172 = scmp.lt.s32.totalorder %s14, 1
      %s173 = scalar_select %p172, %s14, 1
      %s174 = smul.addr %s173, 8
      %s175 = scalar_lea.vmem %s2, %s174
      %p176 = pneg %p87
      %p177 = pneg %p84
      %p178 = pneg %p113
      %p179 = pneg %p110
      %p180 = scmp.lt.s32.totalorder %s14, 1
      %s181 = scalar_select %p180, %s14, 1
      %s182 = smul.addr %s181, 8
      %s183 = scalar_lea.vmem %s3, %s182
      %p184 = scmp.lt.s32.totalorder %s14, 1
      %s185 = scalar_select %p184, %s14, 1
      %s186 = smul.addr %s185, 8
      %s187 = scalar_lea.vmem %s0, %s186
      %p188 = scmp.lt.s32.totalorder %s14, 1
      %s189 = scalar_select %p188, %s14, 1
      %s190 = smul.addr %s189, 8
      %s191 = scalar_lea.vmem %s1, %s190
      %p192 = scmp.lt.s32.totalorder %s14, 1
      %s193 = scalar_select %p192, %s14, 1
      %s194 = smul.addr %s193, 8
      %s195 = scalar_lea.vmem %s2, %s194
      %p196 = scmp.lt.s32.totalorder %s14, 1
      %s197 = scalar_select %p196, %s14, 1
      %s198 = smul.addr %s197, 8
      %s199 = scalar_lea.vmem %s3, %s198
      %v200 = vld [vmem:[%s187] sm:$0xff]
      %vm201 = vcmask 261120
      %v202 = vsel %vm201, %v200, -inf
      %203 = vmax.xlane.f32.xlu0 %v202
      %v204 = vpop.xlane.xlu0 %203
      %v205 = vsub.f32 %v200, %v204
      %v206 = vmul.f32 %v205, 1.442695
      %v207 = vpow.pop %v206
      %v208 = vsel %vm201, %v207, 0.0
      %209 = vadd.xlane.f32.xlu0 %v208
      %v210 = vpop.xlane.xlu0 %209
      %v211 = vlog2.pop %v210
      %v212 = vmul.f32 %v211, 0.6931472
      %v213 = vadd.f32 %v204, %v212
      %v214 = vld [vmem:[%s191] sm:$0xff]
      %v215 = vlaneseq
      %v216 = vand.u32 %v215, 127
      %217 = vset.pattern.permute.xlu0 0
      %218 = vperm.xlu0 %217, %v214
      %v219 = vpop.permute.xlu0 %218
      %vm220 = vcmp.eq.s32.totalorder %v216, %v219
      %v221 = vsel %vm220, %v200, 0.0
      %v222 = vsel %vm201, %v221, 0.0
      %223 = vadd.xlane.f32.xlu0 %v222
      %v224 = vpop.xlane.xlu0 %223
      %v225 = vsub.f32 %v213, %v224
      %v226 = vld [vmem:[%s195] sm:$0xff]
      %v227 = vmul.f32 %v225, %v226
      %vm228 = vcmask 7168
      %229 = vst.msk [vmem:[%s199] sm:$0xff] %vm228, %v227
      %p230 = scmp.lt.s32.totalorder %s14, 1
      %s231 = scalar_select %p230, %s14, 1
      %s232 = smul.addr %s231, 8
      %s233 = scalar_lea.vmem %s3, %s232
      // Predicated region
      $region33: #{tpu_custom_call.1} parent=31 // pred_check
        %p234 = pneg %p110
      $region34: #{tpu_custom_call.1} parent=31 // pred_check_branch
        %236 = sbr.rel (%p234) target = $region36
      $region35: #{tpu_custom_call.1} parent=31 // pred_region
        _
      $region36: #{tpu_custom_call.1} parent=31 // pred_fallthru
        _
    $region32: #{tpu_custom_call.1} parent=5 // pred_fallthru
      _
    %p237 = scmp.le.s32.totalorder 2, %s9
    // Predicated region
    $region37: #{tpu_custom_call.1} parent=5 // pred_check
      %p238 = pneg %p237
    $region38: #{tpu_custom_call.1} parent=5 // pred_check_branch
      %240 = sbr.rel (%p238) target = $region40
    $region39: #{tpu_custom_call.1} parent=5 // pred_region
      %s241 = ssub.s32 %s9, 2
      // Predicated region
      $region41: #{tpu_custom_call.1} parent=39 // pred_check
        %p242 = pneg %p116
      $region42: #{tpu_custom_call.1} parent=39 // pred_check_branch
        %244 = sbr.rel (%p242) target = $region44
      $region43: #{tpu_custom_call.1} parent=39 // pred_region
        %p245 = scmp.lt.s32.totalorder %s15, 1
        %s246 = scalar_select %p245, %s15, 1
        %s247 = smul.addr %s246, 8
        %s248 = scalar_lea.vmem %s3, %s247
      $region44: #{tpu_custom_call.1} parent=39 // pred_fallthru
        _
    $region40: #{tpu_custom_call.1} parent=5 // pred_fallthru
      _
  $region6: #{tpu_custom_call.1} parent=0 // loop_footer
    %s13 = sadd.s32 1, %s9
  $region7: #{tpu_custom_call.1} parent=0 // loop_footer_branch
    %8 = sbr.rel target = $region3
  $region8: #{tpu_custom_call.1} parent=0 // loop_exit
    _

</llo_original>
